<compile_context>
chip_gen: v5e
topology: v5e:2x2
jax: 0.10.0
libtpu: 0.0.40
codegen_flags: <defaults>
</compile_context>

<pallas_src>
import functools

import jax
import jax.numpy as jnp
from jax.experimental import pallas as pl
from jax.experimental.pallas import tpu as pltpu


def _pe_add_3d_kernel(x_ref, pe_ref, o_ref):
    # x_ref/o_ref: (ts, B, D); pe_ref: (ts, 1, D) -> broadcast over the batch
    # (sublane) axis; essentially free on the VPU.
    o_ref[...] = (x_ref[...] + pe_ref[...]).astype(o_ref.dtype)


def _pe_add_2d_kernel(x_ref, pe_ref, o_ref, *, batch):
    # x_ref/o_ref: (ts, B*D) lane-dense tile; pe_ref: (ts, D) table window.
    pe = pe_ref[...]
    if batch > 1:
        # Single broadcast+reshape (jnp.tile), not a batch-way concatenate.
        pe = jnp.tile(pe, (1, batch))
    o_ref[...] = (x_ref[...] + pe).astype(o_ref.dtype)


def learned_positional_encoding(x, pos_emb_table, *, seq_tile=None, donate_x=False):
    """x: (S, B, D); pos_emb_table: (max_len, D). Returns x + pe[:S][:, None, :]."""
    S, B, D = x.shape
    max_len, d_table = pos_emb_table.shape
    if d_table != D:
        raise ValueError(f"d_model mismatch: x has {D}, table has {d_table}")
    if S > max_len:
        raise ValueError(f"seq_len {S} exceeds max_len {max_len}")

    # Match torch type promotion (bf16 x + f32 embedding weight -> f32 output);
    # the promote/cast happens per tile inside the kernel, not on the full table.
    out_dtype = jnp.promote_types(x.dtype, pos_emb_table.dtype)

    x_item = jnp.dtype(x.dtype).itemsize
    out_item = jnp.dtype(out_dtype).itemsize
    pe_item = jnp.dtype(pos_emb_table.dtype).itemsize

    # Packed sublane multiple for the activation dtype: 8 (f32) / 16 (bf16) / 32 (i8).
    sub_mult = 8 * max(1, 4 // x_item)

    # Lane-dense 3-D broadcast path for the common D % 128 == 0 case; otherwise
    # fall back to the 2-D (S, B*D) lane-dense view.
    use_3d = (D % 128 == 0)

    # VMEM budget: query physical capacity (v5e/v6e 128 MiB, v7x 64 MiB) and
    # target ~24 MiB of double-buffered working set, with an explicit limit.
    try:
        info = pltpu.get_tpu_info()
        vmem_cap = int(getattr(info, "vmem_capacity_bytes", 64 * 1024 * 1024))
    except Exception:  # no TPU info available -> conservative default
        vmem_cap = 64 * 1024 * 1024
    target_ws = min(24 * 1024 * 1024, vmem_cap // 3)
    vmem_limit = int(min(96 * 1024 * 1024, (vmem_cap * 3) // 4))

    if seq_tile is None:
        big_item = max(x_item, out_item)
        # Double-buffered x-in + out tiles plus ~1 tile of live values, plus a
        # double-buffered pe tile. In the 3-D path, small B and the pe's size-1
        # batch dim are padded to 8 sublanes in VMEM -- account for it.
        b_eff = ((B + 7) // 8) * 8 if use_3d else B
        pe_rows = 8 if use_3d else 1
        per_row = 5 * b_eff * D * big_item + 2 * pe_rows * D * pe_item
        seq_tile = max(sub_mult, target_ws // max(per_row, 1))

    ts = min(int(seq_tile), S)
    if S >= 2 * sub_mult:
        # Keep >= 2 grid steps so the parallel seq axis can be sharded across
        # v7x's two TensorCores (a 1-step grid idles one core).
        ts = min(ts, pl.cdiv(S // 2, sub_mult) * sub_mult)
    ts = max(sub_mult, (ts // sub_mult) * sub_mult)
    ts = min(ts, S)
    grid = (pl.cdiv(S, ts),)

    cparams = pltpu.CompilerParams(
        dimension_semantics=("parallel",),
        vmem_limit_bytes=vmem_limit,
    )
    io_alias = {0: 0} if (donate_x and jnp.dtype(x.dtype) == jnp.dtype(out_dtype)) else {}

    if use_3d:
        pe3 = pos_emb_table.reshape(max_len, 1, D)  # free reshape (size-1 dim)
        return pl.pallas_call(
            _pe_add_3d_kernel,
            out_shape=jax.ShapeDtypeStruct((S, B, D), out_dtype),
            grid=grid,
            in_specs=[
                pl.BlockSpec((ts, B, D), lambda i: (i, 0, 0)),   # x
                pl.BlockSpec((ts, 1, D), lambda i: (i, 0, 0)),   # pe window
            ],
            out_specs=pl.BlockSpec((ts, B, D), lambda i: (i, 0, 0)),
            compiler_params=cparams,
            input_output_aliases=io_alias,
        )(x, pe3)

    # 2-D lane-dense path (D < 128 or D % 128 != 0).
    table = pos_emb_table
    if ts % 8 != 0:
        # Single whole-sequence block with S not sublane-aligned: slice the
        # table so the pe block equals its full dims (satisfies the tiling rule).
        table = pos_emb_table[:S]

    out2d = pl.pallas_call(
        functools.partial(_pe_add_2d_kernel, batch=B),
        out_shape=jax.ShapeDtypeStruct((S, B * D), out_dtype),
        grid=grid,
        in_specs=[
            pl.BlockSpec((ts, B * D), lambda i: (i, 0)),   # x, lane-dense view
            pl.BlockSpec((ts, D), lambda i: (i, 0)),       # pe table window
        ],
        out_specs=pl.BlockSpec((ts, B * D), lambda i: (i, 0)),
        compiler_params=cparams,
        input_output_aliases=io_alias,
    )(x.reshape(S, B * D), table)

    return out2d.reshape(S, B, D)


if __name__ == "__main__":
    key = jax.random.PRNGKey(0)
    k = jax.random.split(key, 8)

    def ref_fn(xv, table):
        return xv + table[: xv.shape[0]][:, None, :]

    # 1) Module-consistent small shapes: seq=8, batch=2, d_model=32 (2-D path, 1 block).
    table = jax.random.normal(k[0], (512, 32), dtype=jnp.float32)  # nn.Embedding ~ N(0,1)
    x1 = jax.random.normal(k[1], (8, 2, 32), dtype=jnp.float32)
    o1 = jax.block_until_ready(learned_positional_encoding(x1, table))
    assert o1.shape == (8, 2, 32) and o1.dtype == jnp.float32
    assert jnp.allclose(o1, ref_fn(x1, table), atol=1e-6, rtol=1e-6)

    # 2) Multi-tile pipelined 2-D path with a ragged final block.
    x2 = jax.random.normal(k[2], (20, 2, 32), dtype=jnp.float32)
    o2 = jax.block_until_ready(learned_positional_encoding(x2, table, seq_tile=8))
    assert jnp.allclose(o2, ref_fn(x2, table), atol=1e-6, rtol=1e-6)

    # 3) D % 128 == 0 -> 3-D broadcast path, 2 grid steps, ragged final block.
    table128 = jax.random.normal(k[3], (512, 128), dtype=jnp.float32)
    x3 = jax.random.normal(k[4], (24, 2, 128), dtype=jnp.float32)
    o3 = jax.block_until_ready(learned_positional_encoding(x3, table128, seq_tile=16))
    assert jnp.allclose(o3, ref_fn(x3, table128), atol=1e-6, rtol=1e-6)

    # 4) S == max_len with a non-dividing tile (edge-clipped pe and x blocks).
    table20 = jax.random.normal(k[5], (20, 32), dtype=jnp.float32)
    x4 = jax.random.normal(k[6], (20, 2, 32), dtype=jnp.float32)
    o4 = jax.block_until_ready(learned_positional_encoding(x4, table20, seq_tile=8))
    assert jnp.allclose(o4, ref_fn(x4, table20), atol=1e-6, rtol=1e-6)

    # 5) Mixed precision: bf16 activations + f32 table -> f32 output (torch promotion).
    x5 = jax.random.normal(k[7], (16, 2, 32), dtype=jnp.bfloat16)
    o5 = jax.block_until_ready(learned_positional_encoding(x5, table))
    assert o5.dtype == jnp.float32
    assert jnp.allclose(o5, ref_fn(x5.astype(jnp.float32), table), atol=1e-6, rtol=1e-6)

    print("KERNEL_OK")
</pallas_src>

<mosaic_0001>
module attributes {stable_mosaic.version = 11 : i64} {
  func.func @_pe_add_2d_kernel(%arg0: i32, %arg1: memref<8x64xf32, #tpu.memory_space<vmem>>, %arg2: memref<8x32xf32, #tpu.memory_space<vmem>>, %arg3: memref<8x64xf32, #tpu.memory_space<vmem>>) attributes {dimension_semantics = [#tpu.dimension_semantics<parallel>], iteration_bounds = array<i64: 1>, scalar_prefetch = 0 : i64, scratch_operands = 0 : i64, tpu.core_type = #tpu.core_type<tc>, window_params = [{transform_indices = @transform_0, window_bounds = array<i64: 8, 64>}, {transform_indices = @transform_1, window_bounds = array<i64: 8, 32>}, {transform_indices = @transform_2, window_bounds = array<i64: 8, 64>}]} {
    %c0 = arith.constant 0 : index
    %c0_0 = arith.constant 0 : index
    %0 = vector.load %arg2[%c0, %c0_0] : memref<8x32xf32, #tpu.memory_space<vmem>>, vector<8x32xf32>
    %1 = tpu.concatenate %0, %0 in 1 : vector<8x32xf32>, vector<8x32xf32> -> vector<8x64xf32>
    %c0_1 = arith.constant 0 : index
    %c0_2 = arith.constant 0 : index
    %2 = vector.load %arg1[%c0_1, %c0_2] : memref<8x64xf32, #tpu.memory_space<vmem>>, vector<8x64xf32>
    %3 = arith.addf %2, %1 : vector<8x64xf32>
    %c0_3 = arith.constant 0 : index
    %c0_4 = arith.constant 0 : index
    %4 = vector.load %arg3[%c0_3, %c0_4] : memref<8x64xf32, #tpu.memory_space<vmem>>, vector<8x64xf32>
    tpu.vector_store %arg3[%c0_3, %c0_4], %3 {strides = array<i32>} : memref<8x64xf32, #tpu.memory_space<vmem>>, vector<8x64xf32>,
    return
  }
  func.func @transform_0(%arg0: i32) -> (i32, i32) {
    %c0_i32 = arith.constant 0 : i32
    %c0_i32_0 = arith.constant 0 : i32
    return %arg0, %c0_i32 : i32, i32
  }
  func.func @transform_1(%arg0: i32) -> (i32, i32) {
    %c0_i32 = arith.constant 0 : i32
    %c0_i32_0 = arith.constant 0 : i32
    return %arg0, %c0_i32 : i32, i32
  }
  func.func @transform_2(%arg0: i32) -> (i32, i32) {
    %c0_i32 = arith.constant 0 : i32
    %c0_i32_0 = arith.constant 0 : i32
    return %arg0, %c0_i32 : i32, i32
  }
}

</mosaic_0001>

<llo_original>
// kernel: tpu_custom_call.1
$region0: #{tpu_custom_call.1}
  #allocation0 [shape = 'u32[]', space=smem, size = 0x4, offset = 0x4, fixed_abs, tag = 'smem constant byte address 0x4 - core index']
  #allocation1 [shape = 'u32[72,128]{1,0:T(1,128)}', space=vmem, size = 0x9000, scoped, tag = 'internal scratch']
  %s0 = inlined_call_operand.vmem [shape: f32[8,64], index: 0, kind: input, shape index: {}]
  %s1 = inlined_call_operand.vmem [shape: f32[512,32], index: 1, kind: input, shape index: {}]
  %s2 = inlined_call_operand.hbm [shape: f32[8,64], index: 2, kind: output, shape index: {}]
  %s3 = sld [smem:[#allocation0]]
  $region18: #{tpu_custom_call.1} parent=0
    _
  %s5 = ssub.s32 1, %s3
  %s6 = scalar_select 0, %s5, %s3
  $region1: #{tpu_custom_call.1} parent=0
    #allocation2 [shape = 'u8[4096]{0}', space=vmem, size = 0x1000, scoped, tag = 'output window, operand 0, single buffered']
    #allocation3 [shape = 's32[1]{0}', space=sflag, size = 0x4, scoped, tag = 'scoped memory for tpu_custom_call.1']
    %7 = vsyncpa [#allocation3], 0
    // Predicated region
    $region2: #{tpu_custom_call.1} parent=1 // pred_check
      _
    $region3: #{tpu_custom_call.1} parent=1 // pred_check_branch
      %9 = sbr.rel (0) target = $region5
    $region4: #{tpu_custom_call.1} parent=1 // pred_region
      _
    $region5: #{tpu_custom_call.1} parent=1 // pred_fallthru
      _
    // Predicated region
    $region6: #{tpu_custom_call.1} parent=1 // pred_check
      _
    $region7: #{tpu_custom_call.1} parent=1 // pred_check_branch
      %11 = sbr.rel (0) target = $region9
    $region8: #{tpu_custom_call.1} parent=1 // pred_region
      _
    $region9: #{tpu_custom_call.1} parent=1 // pred_fallthru
      _
    %v12 = vld [vmem:[%s1] sm:$0xff]
    %14 = vrot.lane.b32.xlu0 %v12, 32
    %v15 = vpop.permute.xlu0 %14
    %vm17 = vcmask 261120
    %v18 = vsel %vm17, %v12, %v15
    %v19 = vld [vmem:[%s0] sm:$0xff]
    %v20 = vadd.f32 %v19, %v18
    %vm21 = vcmask 523264
    %22 = vst.msk [vmem:[#allocation2] sm:$0xff] %vm21, %v20
    // Predicated region
    $region10: #{tpu_custom_call.1} parent=1 // pred_check
      _
    $region11: #{tpu_custom_call.1} parent=1 // pred_check_branch
      %24 = sbr.rel (0) target = $region13
    $region12: #{tpu_custom_call.1} parent=1 // pred_region
      %26 = vsyncadd [#allocation3], 0
      %s28 = sshll.u32 [#allocation2], 4
      %s29 = int_to_ptr.vmem [resolvable:$true] %s28
      %s30 = sshll.u32 %s2, 4
      %s31 = int_to_ptr.hbm [resolvable:$true] %s30
      %33 = dma.vmem_to_hbm [thread:$0]  %s29, 128, %s31, [#allocation3]
    $region13: #{tpu_custom_call.1} parent=1 // pred_fallthru
      _
    // Predicated region
    $region14: #{tpu_custom_call.1} parent=1 // pred_check
      _
    $region15: #{tpu_custom_call.1} parent=1 // pred_check_branch
      %35 = sbr.rel (0) target = $region17
    $region16: #{tpu_custom_call.1} parent=1 // pred_region
      %37 = dma.done [#allocation3], 128
    $region17: #{tpu_custom_call.1} parent=1 // pred_fallthru
      _
    %38 = vsyncpa [#allocation3], 1

</llo_original>
